<compile_context>
chip_gen: v6e
topology: v6e:2x2x1
jax: 0.10.0
libtpu: 0.0.40
codegen_flags: <defaults>
</compile_context>

<pallas_src>
import functools

import jax
import jax.numpy as jnp
from jax.experimental import pallas as pl
from jax.experimental.pallas import tpu as pltpu


# ----------------------------- helpers ------------------------------------


def _softmax_last(x):
    m = jnp.max(x, axis=-1, keepdims=True)
    e = jnp.exp(x - m)
    return e / jnp.sum(e, axis=-1, keepdims=True)


def _layer_norm(x, gamma, beta, eps=1e-5):
    mu = jnp.mean(x, axis=-1, keepdims=True)
    var = jnp.mean((x - mu) ** 2, axis=-1, keepdims=True)
    return (x - mu) * jax.lax.rsqrt(var + eps) * gamma + beta


def _softplus(z):
    # matches torch.nn.functional.softplus (beta=1, threshold=20), f32 math
    return jnp.where(z > 20.0, z, jnp.log1p(jnp.exp(jnp.minimum(z, 20.0))))


def _round_up(x, m):
    return (x + m - 1) // m * m


def _pick_tile_b(B):
    # Prefer the largest tile that still leaves >=2 grid steps (so the
    # "parallel" batch axis can shard across the two v7x TensorCores); the
    # grid uses cdiv so a partial last tile is fine for awkward batch sizes.
    for t in (512, 256, 128, 64, 32, 16, 8):
        if B >= 2 * t:
            return t
    for t in (512, 256, 128, 64, 32, 16, 8):
        if B >= t:
            return t
    return B


def _resident_spec(block_shape, index_map):
    """BlockSpec for a constant-index_map block (fetched once, never refetched).

    Single-buffered via pipeline_mode=pl.Buffered(1) to halve its VMEM
    footprint (matters most on v7x's 64 MiB part); falls back to a plain
    spec if this jax version does not support pipeline_mode.
    """
    try:
        return pl.BlockSpec(block_shape, index_map, pipeline_mode=pl.Buffered(1))
    except (AttributeError, TypeError):
        return pl.BlockSpec(block_shape, index_map)


# ----------------------------- kernels ------------------------------------


def mlp_kernel(x_ref, w1, b1, w2, b2, w3, b3, w4, b4, wh, bh, out_ref, sig_ref):
    """relu(fc1..fc4) stack + fused [last_layer | sig_linear] head.

    Grid axis 0 tiles the batch; weights use constant index_maps (and
    Buffered(1)) so they stay resident in VMEM across batch tiles while
    x / out tiles are software-pipelined.  All matmul operands are bf16,
    accumulation is f32.  Output slabs are lane-dense (P_pad % 128 == 0);
    softplus is only evaluated on the sigma half.
    """
    h = x_ref[...]                                             # bf16
    for w, b in ((w1, b1), (w2, b2), (w3, b3), (w4, b4)):
        a = jnp.dot(h, w[...], preferred_element_type=jnp.float32) + b[...]
        h = jnp.maximum(a, 0.0).astype(jnp.bfloat16)           # relu, back to bf16
    z = jnp.dot(h, wh[...], preferred_element_type=jnp.float32) + bh[...]
    p_pad = out_ref.shape[-1]                                  # multiple of 128
    out_ref[...] = z[:, :p_pad]                                # raw output lanes
    sig_ref[...] = _softplus(z[:, p_pad:])                     # softplus(sigma) only


def encoder_stack_kernel(n_heads,
                         s_ref, wq, bq, wk, bk, wv, bv, wo, bo,
                         wf1, bf1, wf2, bf2, g1, be1, g2, be2, wg, bg,
                         fw_ref, s_carry):
    """All d_layers encoder layers + weight_gen fused into one kernel.

    Grid axis 0 iterates layers; S is carried in f32 VMEM scratch across
    layers.  Matmul operands are bf16 with f32 accumulation; LayerNorm and
    softmax stay in f32.  On the last layer the weight_gen linear, the
    triangular masked_fill and the row softmax run on the resident S.
    """
    layer = pl.program_id(0)

    @pl.when(layer == 0)
    def _():
        s_carry[...] = s_ref[...]

    s = s_carry[...]                       # f32 (L, D)
    L, D = s.shape
    dh = D // n_heads
    sb = s.astype(jnp.bfloat16)

    # Wq / bq are pre-scaled by 1/sqrt(dh) in the wrapper (scale hoisted).
    q = jnp.dot(sb, wq[...], preferred_element_type=jnp.float32) + bq[...]
    k = jnp.dot(sb, wk[...], preferred_element_type=jnp.float32) + bk[...]
    v = jnp.dot(sb, wv[...], preferred_element_type=jnp.float32) + bv[...]

    # Batched multi-head attention: one (heads, L, dh) contraction pair,
    # no per-head Python loop / concatenate.  Batch dim is kept leading
    # (the canonical form Mosaic's dot_general lowering supports).
    q3 = q.astype(jnp.bfloat16).reshape(L, n_heads, dh).transpose(1, 0, 2)
    k3 = k.astype(jnp.bfloat16).reshape(L, n_heads, dh).transpose(1, 0, 2)
    v3 = v.astype(jnp.bfloat16).reshape(L, n_heads, dh).transpose(1, 0, 2)
    sc = jnp.einsum("hld,hmd->hlm", q3, k3, preferred_element_type=jnp.float32)
    pr = _softmax_last(sc)                                     # f32 softmax
    ctx = jnp.einsum("hlm,hmd->hld", pr.astype(jnp.bfloat16), v3,
                     preferred_element_type=jnp.float32)
    attn = ctx.transpose(1, 0, 2).reshape(L, D)
    attn = jnp.dot(attn.astype(jnp.bfloat16), wo[...],
                   preferred_element_type=jnp.float32) + bo[...]

    x = _layer_norm(s + attn, g1[...], be1[...])               # f32

    y = jnp.maximum(jnp.dot(x.astype(jnp.bfloat16), wf1[...],
                            preferred_element_type=jnp.float32) + bf1[...], 0.0)
    y = jnp.dot(y.astype(jnp.bfloat16), wf2[...],
                preferred_element_type=jnp.float32) + bf2[...]

    new_s = _layer_norm(x + y, g2[...], be2[...])
    s_carry[...] = new_s

    @pl.when(layer == pl.num_programs(0) - 1)
    def _():
        raw = jnp.dot(new_s.astype(jnp.bfloat16), wg[...],
                      preferred_element_type=jnp.float32) + bg[...]
        rows, cols = raw.shape
        row = jax.lax.broadcasted_iota(jnp.int32, (rows, cols), 0)
        col = jax.lax.broadcasted_iota(jnp.int32, (rows, cols), 1)
        masked = jnp.where(col > row, jnp.float32(-1e9), raw)
        fw_ref[...] = _softmax_last(masked)   # softmax(dim=1) of (pred_len, pred_len)


# ----------------------------- wrappers -------------------------------------


def gmm_fnn_mlp_forward(x, p):
    """Batch-dependent part: (output, sigma)."""
    if x.ndim == 3 and x.shape[-1] == 1:
        x = x[..., 0]
    x = x.astype(jnp.float32)

    B, hist_len = x.shape
    hidden = p["W1"].shape[1]
    pred_len = p["W_out"].shape[1]
    p_pad = max(128, _round_up(pred_len, 128))     # lane-dense output slabs

    def padw(w):   # (hidden, pred_len) -> (hidden, p_pad), bf16
        return jnp.pad(w, ((0, 0), (0, p_pad - pred_len))).astype(jnp.bfloat16)

    def padb(b):   # (1, pred_len) -> (1, p_pad), f32
        return jnp.pad(b, ((0, 0), (0, p_pad - pred_len))).astype(jnp.float32)

    # fused [last_layer | sig_linear] head, each half lane-padded to p_pad
    w_head = jnp.concatenate([padw(p["W_out"]), padw(p["W_sig"])], axis=1)
    b_head = jnp.concatenate([padb(p["b_out"]), padb(p["b_sig"])], axis=1)

    xb = x.astype(jnp.bfloat16)
    w1 = p["W1"].astype(jnp.bfloat16)
    w2 = p["W2"].astype(jnp.bfloat16)
    w3 = p["W3"].astype(jnp.bfloat16)
    w4 = p["W4"].astype(jnp.bfloat16)

    tile_b = _pick_tile_b(B)
    grid = (pl.cdiv(B, tile_b),)

    x_map = lambda i: (i, 0)
    c_map = lambda i: (0, 0)

    out, sig = pl.pallas_call(
        mlp_kernel,
        out_shape=(
            jax.ShapeDtypeStruct((B, p_pad), jnp.float32),
            jax.ShapeDtypeStruct((B, p_pad), jnp.float32),
        ),
        grid=grid,
        in_specs=[
            pl.BlockSpec((tile_b, hist_len), x_map),
            _resident_spec((hist_len, hidden), c_map),
            _resident_spec((1, hidden), c_map),
            _resident_spec((hidden, hidden), c_map),
            _resident_spec((1, hidden), c_map),
            _resident_spec((hidden, hidden), c_map),
            _resident_spec((1, hidden), c_map),
            _resident_spec((hidden, hidden), c_map),
            _resident_spec((1, hidden), c_map),
            _resident_spec((hidden, 2 * p_pad), c_map),
            _resident_spec((1, 2 * p_pad), c_map),
        ],
        out_specs=(
            pl.BlockSpec((tile_b, p_pad), x_map),
            pl.BlockSpec((tile_b, p_pad), x_map),
        ),
        compiler_params=pltpu.CompilerParams(
            dimension_semantics=("parallel",),
            vmem_limit_bytes=48 * 1024 * 1024,
        ),
    )(xb, w1, p["b1"], w2, p["b2"], w3, p["b3"], w4, p["b4"], w_head, b_head)

    return out[:, :pred_len], sig[:, :pred_len]


def compute_final_weight(p, *, n_heads):
    """Batch-independent weight path (encoder stack + weight_gen).

    Depends only on params, so callers may compute it once and reuse it
    across forward calls (it is fully hoisted out of the per-batch MLP).
    """
    hidden = p["W1"].shape[1]
    pred_len = p["W_out"].shape[1]
    d_ff = p["encoder_layers"][0]["Wf1"].shape[1]
    d_layers = len(p["encoder_layers"])
    assert hidden % n_heads == 0, "hidden_units must be divisible by n_heads"

    s = p["W_out"].T.astype(jnp.float32)          # S = last_layer.weight (pred_len, hidden)
    dh = hidden // n_heads
    scale = jnp.float32(1.0 / (dh ** 0.5))

    def stack(name):
        return jnp.stack([lp[name] for lp in p["encoder_layers"]], axis=0)

    def stack_bf16(name):
        return stack(name).astype(jnp.bfloat16)

    Wq = (stack("Wq") * scale).astype(jnp.bfloat16)   # attention scale hoisted
    bq = stack("bq") * scale                          # biases stay f32
    Wk, bk = stack_bf16("Wk"), stack("bk")
    Wv, bv = stack_bf16("Wv"), stack("bv")
    Wo, bo = stack_bf16("Wo"), stack("bo")
    Wf1, bf1 = stack_bf16("Wf1"), stack("bf1")
    Wf2, bf2 = stack_bf16("Wf2"), stack("bf2")
    G1, BE1 = stack("g1"), stack("be1")
    G2, BE2 = stack("g2"), stack("be2")
    Wg = p["W_gen"].astype(jnp.bfloat16)
    bg = p["b_gen"].astype(jnp.float32)

    lmap3 = lambda l: (l, 0, 0)
    lmap2 = lambda l: (0, 0)

    def wspec(in_f, out_f):
        # per-layer (in_f, out_f) tile; layer dim squeezed; this block changes
        # every grid step so it keeps default double-buffering.
        return pl.BlockSpec((None, in_f, out_f), lmap3)

    final_weight = pl.pallas_call(
        functools.partial(encoder_stack_kernel, n_heads),
        out_shape=jax.ShapeDtypeStruct((pred_len, pred_len), jnp.float32),
        grid=(d_layers,),
        in_specs=[
            _resident_spec((pred_len, hidden), lmap2),  # S (fetched once)
            wspec(hidden, hidden), wspec(1, hidden),    # Wq, bq
            wspec(hidden, hidden), wspec(1, hidden),    # Wk, bk
            wspec(hidden, hidden), wspec(1, hidden),    # Wv, bv
            wspec(hidden, hidden), wspec(1, hidden),    # Wo, bo
            wspec(hidden, d_ff), wspec(1, d_ff),        # Wf1, bf1
            wspec(d_ff, hidden), wspec(1, hidden),      # Wf2, bf2
            wspec(1, hidden), wspec(1, hidden),         # g1, be1
            wspec(1, hidden), wspec(1, hidden),         # g2, be2
            _resident_spec((hidden, pred_len), lmap2),  # W_gen (fetched once)
            _resident_spec((1, pred_len), lmap2),       # b_gen (fetched once)
        ],
        out_specs=pl.BlockSpec((pred_len, pred_len), lmap2),
        scratch_shapes=[pltpu.VMEM((pred_len, hidden), jnp.float32)],
        compiler_params=pltpu.CompilerParams(
            dimension_semantics=("arbitrary",),   # serial S carry across layers
            # NOTE: on v7x (64 MiB VMEM) keep this well under physical; bf16
            # weights already halve the per-layer double-buffered footprint.
            vmem_limit_bytes=48 * 1024 * 1024,
        ),
    )(s, Wq, bq, Wk, bk, Wv, bv, Wo, bo, Wf1, bf1, Wf2, bf2,
      G1, BE1, G2, BE2, Wg, bg)

    return final_weight


def gmm_fnn_forward(x, params, *, n_heads, final_weight=None):
    output, sigma = gmm_fnn_mlp_forward(x, params)
    if final_weight is None:
        # Batch-independent; cache/reuse this in serving instead of recomputing.
        final_weight = compute_final_weight(params, n_heads=n_heads)
    return output, sigma, final_weight


# ----------------------------- params --------------------------------------


def init_params(key, hist_len, hidden, pred_len, d_ff, d_layers):
    keys = iter(jax.random.split(key, 128))

    def lin(in_f, out_f):
        bound = 1.0 / float(in_f) ** 0.5
        w = jax.random.uniform(next(keys), (in_f, out_f), jnp.float32, -bound, bound)
        b = jax.random.uniform(next(keys), (1, out_f), jnp.float32, -bound, bound)
        return w, b

    p = {}
    p["W1"], p["b1"] = lin(hist_len, hidden)
    p["W2"], p["b2"] = lin(hidden, hidden)
    p["W3"], p["b3"] = lin(hidden, hidden)
    p["W4"], p["b4"] = lin(hidden, hidden)
    p["W_out"], p["b_out"] = lin(hidden, pred_len)
    p["W_sig"], p["b_sig"] = lin(hidden, pred_len)
    p["W_gen"], p["b_gen"] = lin(hidden, pred_len)

    layers = []
    for _ in range(d_layers):
        lp = {}
        lp["Wq"], lp["bq"] = lin(hidden, hidden)
        lp["Wk"], lp["bk"] = lin(hidden, hidden)
        lp["Wv"], lp["bv"] = lin(hidden, hidden)
        lp["Wo"], lp["bo"] = lin(hidden, hidden)
        lp["Wf1"], lp["bf1"] = lin(hidden, d_ff)
        lp["Wf2"], lp["bf2"] = lin(d_ff, hidden)
        lp["g1"] = jnp.ones((1, hidden), jnp.float32)
        lp["be1"] = jnp.zeros((1, hidden), jnp.float32)
        lp["g2"] = jnp.ones((1, hidden), jnp.float32)
        lp["be2"] = jnp.zeros((1, hidden), jnp.float32)
        layers.append(lp)
    p["encoder_layers"] = layers
    return p


if __name__ == "__main__":
    # small, shape-consistent config
    batch = 4
    hist_len = 16
    hidden_units = 32
    pred_len = 8
    n_heads = 4
    d_ff = 64
    d_layers = 2

    key = jax.random.PRNGKey(0)
    kx, kp = jax.random.split(key)

    x = jax.random.normal(kx, (batch, hist_len, 1), jnp.float32)  # squeeze -> (batch, hist_len)
    params = init_params(kp, hist_len, hidden_units, pred_len, d_ff, d_layers)

    output, sigma, final_weight = gmm_fnn_forward(x, params, n_heads=n_heads)
    jax.block_until_ready((output, sigma, final_weight))

    # structural checks
    assert output.shape == (batch, pred_len)
    assert sigma.shape == (batch, pred_len)
    assert final_weight.shape == (pred_len, pred_len)
    assert bool(jnp.all(sigma >= 0.0))
    # rows of final_weight are softmaxed over masked entries -> sum to 1
    assert bool(jnp.allclose(jnp.sum(final_weight, axis=1), 1.0, atol=1e-5))

    # numerical check of the MLP trunk against a pure-f32 jnp reference
    xs = x[..., 0]
    h = xs
    for i in (1, 2, 3, 4):
        h = jnp.maximum(h @ params[f"W{i}"] + params[f"b{i}"], 0.0)
    ref_out = h @ params["W_out"] + params["b_out"]
    ref_sig = jax.nn.softplus(h @ params["W_sig"] + params["b_sig"])
    assert bool(jnp.allclose(output, ref_out, atol=5e-2, rtol=5e-2))
    assert bool(jnp.allclose(sigma, ref_sig, atol=5e-2, rtol=5e-2))

    print("KERNEL_OK")
</pallas_src>

<mosaic_0001>
module attributes {stable_mosaic.version = 11 : i64} {
  func.func @mlp_kernel(%arg0: i32, %arg1: memref<4x16xbf16, #tpu.memory_space<vmem>>, %arg2: memref<16x32xbf16, #tpu.memory_space<vmem>>, %arg3: memref<1x32xf32, #tpu.memory_space<vmem>>, %arg4: memref<32x32xbf16, #tpu.memory_space<vmem>>, %arg5: memref<1x32xf32, #tpu.memory_space<vmem>>, %arg6: memref<32x32xbf16, #tpu.memory_space<vmem>>, %arg7: memref<1x32xf32, #tpu.memory_space<vmem>>, %arg8: memref<32x32xbf16, #tpu.memory_space<vmem>>, %arg9: memref<1x32xf32, #tpu.memory_space<vmem>>, %arg10: memref<32x256xbf16, #tpu.memory_space<vmem>>, %arg11: memref<1x256xf32, #tpu.memory_space<vmem>>, %arg12: memref<4x128xf32, #tpu.memory_space<vmem>>, %arg13: memref<4x128xf32, #tpu.memory_space<vmem>>) attributes {dimension_semantics = [#tpu.dimension_semantics<parallel>], iteration_bounds = array<i64: 1>, scalar_prefetch = 0 : i64, scratch_operands = 0 : i64, tpu.core_type = #tpu.core_type<tc>, window_params = [{transform_indices = @transform_0, window_bounds = array<i64: 4, 16>}, {pipeline_mode = #tpu.pipeline_mode<synchronous>, transform_indices = @transform_1, window_bounds = array<i64: 16, 32>}, {pipeline_mode = #tpu.pipeline_mode<synchronous>, transform_indices = @transform_2, window_bounds = array<i64: 1, 32>}, {pipeline_mode = #tpu.pipeline_mode<synchronous>, transform_indices = @transform_3, window_bounds = array<i64: 32, 32>}, {pipeline_mode = #tpu.pipeline_mode<synchronous>, transform_indices = @transform_4, window_bounds = array<i64: 1, 32>}, {pipeline_mode = #tpu.pipeline_mode<synchronous>, transform_indices = @transform_5, window_bounds = array<i64: 32, 32>}, {pipeline_mode = #tpu.pipeline_mode<synchronous>, transform_indices = @transform_6, window_bounds = array<i64: 1, 32>}, {pipeline_mode = #tpu.pipeline_mode<synchronous>, transform_indices = @transform_7, window_bounds = array<i64: 32, 32>}, {pipeline_mode = #tpu.pipeline_mode<synchronous>, transform_indices = @transform_8, window_bounds = array<i64: 1, 32>}, {pipeline_mode = #tpu.pipeline_mode<synchronous>, transform_indices = @transform_9, window_bounds = array<i64: 32, 256>}, {pipeline_mode = #tpu.pipeline_mode<synchronous>, transform_indices = @transform_10, window_bounds = array<i64: 1, 256>}, {transform_indices = @transform_11, window_bounds = array<i64: 4, 128>}, {transform_indices = @transform_12, window_bounds = array<i64: 4, 128>}]} {
    %c0 = arith.constant 0 : index
    %c0_0 = arith.constant 0 : index
    %0 = vector.load %arg1[%c0, %c0_0] : memref<4x16xbf16, #tpu.memory_space<vmem>>, vector<4x16xbf16>
    %c0_1 = arith.constant 0 : index
    %c0_2 = arith.constant 0 : index
    %1 = vector.load %arg2[%c0_1, %c0_2] : memref<16x32xbf16, #tpu.memory_space<vmem>>, vector<16x32xbf16>
    %cst = arith.constant dense<0.000000e+00> : vector<4x32xf32>
    %2 = tpu.matmul %0, %1, %cst {dimension_numbers = #tpu.dot_dimension_numbers<[1], [0], [0], [1], [0, 0, 1, 1], [], []>} : vector<4x16xbf16>, vector<16x32xbf16>, vector<4x32xf32> -> vector<4x32xf32>
    %c0_3 = arith.constant 0 : index
    %c0_4 = arith.constant 0 : index
    %3 = vector.load %arg3[%c0_3, %c0_4] : memref<1x32xf32, #tpu.memory_space<vmem>>, vector<1x32xf32>
    %4 = vector.broadcast %3 : vector<1x32xf32> to vector<4x32xf32>
    %5 = arith.addf %2, %4 : vector<4x32xf32>
    %cst_5 = arith.constant 0.000000e+00 : f32
    %6 = vector.broadcast %cst_5 : f32 to vector<4x32xf32>
    %7 = arith.maximumf %5, %6 : vector<4x32xf32>
    %8 = arith.truncf %7 : vector<4x32xf32> to vector<4x32xbf16>
    %c0_6 = arith.constant 0 : index
    %c0_7 = arith.constant 0 : index
    %9 = vector.load %arg4[%c0_6, %c0_7] : memref<32x32xbf16, #tpu.memory_space<vmem>>, vector<32x32xbf16>
    %cst_8 = arith.constant dense<0.000000e+00> : vector<4x32xf32>
    %10 = tpu.matmul %8, %9, %cst_8 {dimension_numbers = #tpu.dot_dimension_numbers<[1], [0], [0], [1], [0, 0, 1, 1], [], []>} : vector<4x32xbf16>, vector<32x32xbf16>, vector<4x32xf32> -> vector<4x32xf32>
    %c0_9 = arith.constant 0 : index
    %c0_10 = arith.constant 0 : index
    %11 = vector.load %arg5[%c0_9, %c0_10] : memref<1x32xf32, #tpu.memory_space<vmem>>, vector<1x32xf32>
    %12 = vector.broadcast %11 : vector<1x32xf32> to vector<4x32xf32>
    %13 = arith.addf %10, %12 : vector<4x32xf32>
    %cst_11 = arith.constant 0.000000e+00 : f32
    %14 = vector.broadcast %cst_11 : f32 to vector<4x32xf32>
    %15 = arith.maximumf %13, %14 : vector<4x32xf32>
    %16 = arith.truncf %15 : vector<4x32xf32> to vector<4x32xbf16>
    %c0_12 = arith.constant 0 : index
    %c0_13 = arith.constant 0 : index
    %17 = vector.load %arg6[%c0_12, %c0_13] : memref<32x32xbf16, #tpu.memory_space<vmem>>, vector<32x32xbf16>
    %cst_14 = arith.constant dense<0.000000e+00> : vector<4x32xf32>
    %18 = tpu.matmul %16, %17, %cst_14 {dimension_numbers = #tpu.dot_dimension_numbers<[1], [0], [0], [1], [0, 0, 1, 1], [], []>} : vector<4x32xbf16>, vector<32x32xbf16>, vector<4x32xf32> -> vector<4x32xf32>
    %c0_15 = arith.constant 0 : index
    %c0_16 = arith.constant 0 : index
    %19 = vector.load %arg7[%c0_15, %c0_16] : memref<1x32xf32, #tpu.memory_space<vmem>>, vector<1x32xf32>
    %20 = vector.broadcast %19 : vector<1x32xf32> to vector<4x32xf32>
    %21 = arith.addf %18, %20 : vector<4x32xf32>
    %cst_17 = arith.constant 0.000000e+00 : f32
    %22 = vector.broadcast %cst_17 : f32 to vector<4x32xf32>
    %23 = arith.maximumf %21, %22 : vector<4x32xf32>
    %24 = arith.truncf %23 : vector<4x32xf32> to vector<4x32xbf16>
    %c0_18 = arith.constant 0 : index
    %c0_19 = arith.constant 0 : index
    %25 = vector.load %arg8[%c0_18, %c0_19] : memref<32x32xbf16, #tpu.memory_space<vmem>>, vector<32x32xbf16>
    %cst_20 = arith.constant dense<0.000000e+00> : vector<4x32xf32>
    %26 = tpu.matmul %24, %25, %cst_20 {dimension_numbers = #tpu.dot_dimension_numbers<[1], [0], [0], [1], [0, 0, 1, 1], [], []>} : vector<4x32xbf16>, vector<32x32xbf16>, vector<4x32xf32> -> vector<4x32xf32>
    %c0_21 = arith.constant 0 : index
    %c0_22 = arith.constant 0 : index
    %27 = vector.load %arg9[%c0_21, %c0_22] : memref<1x32xf32, #tpu.memory_space<vmem>>, vector<1x32xf32>
    %28 = vector.broadcast %27 : vector<1x32xf32> to vector<4x32xf32>
    %29 = arith.addf %26, %28 : vector<4x32xf32>
    %cst_23 = arith.constant 0.000000e+00 : f32
    %30 = vector.broadcast %cst_23 : f32 to vector<4x32xf32>
    %31 = arith.maximumf %29, %30 : vector<4x32xf32>
    %32 = arith.truncf %31 : vector<4x32xf32> to vector<4x32xbf16>
    %c0_24 = arith.constant 0 : index
    %c0_25 = arith.constant 0 : index
    %33 = vector.load %arg10[%c0_24, %c0_25] : memref<32x256xbf16, #tpu.memory_space<vmem>>, vector<32x256xbf16>
    %cst_26 = arith.constant dense<0.000000e+00> : vector<4x256xf32>
    %34 = tpu.matmul %32, %33, %cst_26 {dimension_numbers = #tpu.dot_dimension_numbers<[1], [0], [0], [1], [0, 0, 1, 1], [], []>} : vector<4x32xbf16>, vector<32x256xbf16>, vector<4x256xf32> -> vector<4x256xf32>
    %c0_27 = arith.constant 0 : index
    %c0_28 = arith.constant 0 : index
    %35 = vector.load %arg11[%c0_27, %c0_28] : memref<1x256xf32, #tpu.memory_space<vmem>>, vector<1x256xf32>
    %36 = vector.broadcast %35 : vector<1x256xf32> to vector<4x256xf32>
    %37 = arith.addf %34, %36 : vector<4x256xf32>
    %38 = vector.extract_strided_slice %37 {offsets = [0, 0], sizes = [4, 128], strides = [1, 1]} : vector<4x256xf32> to vector<4x128xf32>
    %c0_29 = arith.constant 0 : index
    %c0_30 = arith.constant 0 : index
    %39 = vector.load %arg12[%c0_29, %c0_30] : memref<4x128xf32, #tpu.memory_space<vmem>>, vector<4x128xf32>
    tpu.vector_store %arg12[%c0_29, %c0_30], %38 {strides = array<i32>} : memref<4x128xf32, #tpu.memory_space<vmem>>, vector<4x128xf32>,
    %40 = vector.extract_strided_slice %37 {offsets = [0, 128], sizes = [4, 128], strides = [1, 1]} : vector<4x256xf32> to vector<4x128xf32>
    %cst_31 = arith.constant 2.000000e+01 : f32
    %41 = vector.broadcast %cst_31 : f32 to vector<4x128xf32>
    %42 = arith.cmpf ogt, %40, %41 : vector<4x128xf32>
    %cst_32 = arith.constant 2.000000e+01 : f32
    %43 = vector.broadcast %cst_32 : f32 to vector<4x128xf32>
    %44 = arith.minimumf %40, %43 : vector<4x128xf32>
    %45 = math.exp %44 : vector<4x128xf32>
    %46 = math.log1p %45 : vector<4x128xf32>
    %47 = arith.select %42, %40, %46 : vector<4x128xi1>, vector<4x128xf32>
    %c0_33 = arith.constant 0 : index
    %c0_34 = arith.constant 0 : index
    %48 = vector.load %arg13[%c0_33, %c0_34] : memref<4x128xf32, #tpu.memory_space<vmem>>, vector<4x128xf32>
    tpu.vector_store %arg13[%c0_33, %c0_34], %47 {strides = array<i32>} : memref<4x128xf32, #tpu.memory_space<vmem>>, vector<4x128xf32>,
    return
  }
  func.func @transform_0(%arg0: i32) -> (i32, i32) {
    %c0_i32 = arith.constant 0 : i32
    %c0_i32_0 = arith.constant 0 : i32
    return %arg0, %c0_i32 : i32, i32
  }
  func.func @transform_1(%arg0: i32) -> (i32, i32) {
    %c0_i32 = arith.constant 0 : i32
    %c0_i32_0 = arith.constant 0 : i32
    %c0_i32_1 = arith.constant 0 : i32
    return %c0_i32, %c0_i32_0 : i32, i32
  }
  func.func @transform_2(%arg0: i32) -> (i32, i32) {
    %c0_i32 = arith.constant 0 : i32
    %c0_i32_0 = arith.constant 0 : i32
    %c0_i32_1 = arith.constant 0 : i32
    return %c0_i32, %c0_i32_0 : i32, i32
  }
  func.func @transform_3(%arg0: i32) -> (i32, i32) {
    %c0_i32 = arith.constant 0 : i32
    %c0_i32_0 = arith.constant 0 : i32
    %c0_i32_1 = arith.constant 0 : i32
    return %c0_i32, %c0_i32_0 : i32, i32
  }
  func.func @transform_4(%arg0: i32) -> (i32, i32) {
    %c0_i32 = arith.constant 0 : i32
    %c0_i32_0 = arith.constant 0 : i32
    %c0_i32_1 = arith.constant 0 : i32
    return %c0_i32, %c0_i32_0 : i32, i32
  }
  func.func @transform_5(%arg0: i32) -> (i32, i32) {
    %c0_i32 = arith.constant 0 : i32
    %c0_i32_0 = arith.constant 0 : i32
    %c0_i32_1 = arith.constant 0 : i32
    return %c0_i32, %c0_i32_0 : i32, i32
  }
  func.func @transform_6(%arg0: i32) -> (i32, i32) {
    %c0_i32 = arith.constant 0 : i32
    %c0_i32_0 = arith.constant 0 : i32
    %c0_i32_1 = arith.constant 0 : i32
    return %c0_i32, %c0_i32_0 : i32, i32
  }
  func.func @transform_7(%arg0: i32) -> (i32, i32) {
    %c0_i32 = arith.constant 0 : i32
    %c0_i32_0 = arith.constant 0 : i32
    %c0_i32_1 = arith.constant 0 : i32
    return %c0_i32, %c0_i32_0 : i32, i32
  }
  func.func @transform_8(%arg0: i32) -> (i32, i32) {
    %c0_i32 = arith.constant 0 : i32
    %c0_i32_0 = arith.constant 0 : i32
    %c0_i32_1 = arith.constant 0 : i32
    return %c0_i32, %c0_i32_0 : i32, i32
  }
  func.func @transform_9(%arg0: i32) -> (i32, i32) {
    %c0_i32 = arith.constant 0 : i32
    %c0_i32_0 = arith.constant 0 : i32
    %c0_i32_1 = arith.constant 0 : i32
    return %c0_i32, %c0_i32_0 : i32, i32
  }
  func.func @transform_10(%arg0: i32) -> (i32, i32) {
    %c0_i32 = arith.constant 0 : i32
    %c0_i32_0 = arith.constant 0 : i32
    %c0_i32_1 = arith.constant 0 : i32
    return %c0_i32, %c0_i32_0 : i32, i32
  }
  func.func @transform_11(%arg0: i32) -> (i32, i32) {
    %c0_i32 = arith.constant 0 : i32
    %c0_i32_0 = arith.constant 0 : i32
    return %arg0, %c0_i32 : i32, i32
  }
  func.func @transform_12(%arg0: i32) -> (i32, i32) {
    %c0_i32 = arith.constant 0 : i32
    %c0_i32_0 = arith.constant 0 : i32
    return %arg0, %c0_i32 : i32, i32
  }
}

</mosaic_0001>

<llo_original>
// kernel: tpu_custom_call.1
$region0: #{tpu_custom_call.1}
  #allocation0 [shape = 'u32[]', space=smem, size = 0x4, offset = 0x4, fixed_abs, tag = 'smem constant byte address 0x4 - core index']
  #allocation1 [shape = 'u32[144,128]{1,0:T(1,128)}', space=vmem, size = 0x12000, scoped, tag = 'internal scratch']
  %s0 = inlined_call_operand.hbm [shape: bf16[4,16], index: 0, kind: input, shape index: {}]
  %s1 = inlined_call_operand.hbm [shape: bf16[16,32], index: 1, kind: input, shape index: {}]
  %s2 = inlined_call_operand.vmem [shape: f32[1,32], index: 2, kind: input, shape index: {}]
  %s3 = inlined_call_operand.hbm [shape: bf16[32,32], index: 3, kind: input, shape index: {}]
  %s4 = inlined_call_operand.vmem [shape: f32[1,32], index: 4, kind: input, shape index: {}]
  %s5 = inlined_call_operand.hbm [shape: bf16[32,32], index: 5, kind: input, shape index: {}]
  %s6 = inlined_call_operand.vmem [shape: f32[1,32], index: 6, kind: input, shape index: {}]
  %s7 = inlined_call_operand.hbm [shape: bf16[32,32], index: 7, kind: input, shape index: {}]
  %s8 = inlined_call_operand.vmem [shape: f32[1,32], index: 8, kind: input, shape index: {}]
  %s9 = inlined_call_operand.hbm [shape: bf16[32,256], index: 9, kind: input, shape index: {}]
  %s10 = inlined_call_operand.vmem [shape: f32[1,256], index: 10, kind: input, shape index: {}]
  %s11 = inlined_call_operand.hbm [shape: f32[4,128], index: 11, kind: output, shape index: {0}]
  %s12 = inlined_call_operand.hbm [shape: f32[4,128], index: 12, kind: output, shape index: {1}]
  %13 = xla_tuple %s11, %s12
  %s14 = sld [smem:[#allocation0]]
  $region86: #{tpu_custom_call.1} parent=0
    _
  %s16 = ssub.s32 1, %s14
  %s17 = scalar_select 0, %s16, %s14
  $region1: #{tpu_custom_call.1} parent=0
    #allocation2 [shape = 'u8[1024]{0}', space=vmem, size = 0x400, scoped, tag = 'input window, operand 0, single buffered']
    #allocation3 [shape = 's32[1]{0}', space=sflag, size = 0x4, scoped, tag = 'scoped memory for tpu_custom_call.1']
    #allocation4 [shape = 's32[1]{0}', space=sflag, size = 0x4, scoped, tag = 'scoped memory for tpu_custom_call.1']
    #allocation5 [shape = 'u8[4096]{0}', space=vmem, size = 0x1000, scoped, tag = 'input window, operand 1, single buffered']
    #allocation6 [shape = 's32[1]{0}', space=sflag, size = 0x4, scoped, tag = 'scoped memory for tpu_custom_call.1']
    #allocation7 [shape = 'u8[8192]{0}', space=vmem, size = 0x2000, scoped, tag = 'input window, operand 3, single buffered']
    #allocation8 [shape = 'u8[8192]{0}', space=vmem, size = 0x2000, scoped, tag = 'input window, operand 5, single buffered']
    #allocation9 [shape = 's32[1]{0}', space=sflag, size = 0x4, scoped, tag = 'scoped memory for tpu_custom_call.1']
    #allocation10 [shape = 'u8[8192]{0}', space=vmem, size = 0x2000, scoped, tag = 'input window, operand 7, single buffered']
    #allocation11 [shape = 'u8[16384]{0}', space=vmem, size = 0x4000, scoped, tag = 'input window, operand 9, single buffered']
    #allocation12 [shape = 's32[1]{0}', space=sflag, size = 0x4, scoped, tag = 'scoped memory for tpu_custom_call.1']
    #allocation13 [shape = 'u8[2048]{0}', space=vmem, size = 0x800, scoped, tag = 'output window, operand 0, single buffered']
    #allocation14 [shape = 'u8[2048]{0}', space=vmem, size = 0x800, scoped, tag = 'output window, operand 1, single buffered']
    #allocation15 [shape = 's32[1]{0}', space=sflag, size = 0x4, scoped, tag = 'scoped memory for tpu_custom_call.1']
    %18 = vsyncpa [#allocation3], 0
    %19 = vsyncpa [#allocation6], 0
    %20 = vsyncpa [#allocation9], 0
    %21 = vsyncpa [#allocation12], 0
    %22 = vsyncpa [#allocation4], 0
    %23 = vsyncpa [#allocation15], 0
    // Predicated region
    $region2: #{tpu_custom_call.1} parent=1 // pred_check
      _
    $region3: #{tpu_custom_call.1} parent=1 // pred_check_branch
      %25 = sbr.rel (0) target = $region5
    $region4: #{tpu_custom_call.1} parent=1 // pred_region
      %s27 = ssub.s32 32, 32
      %28 = vsyncadd [#allocation3], %s27
      %s30 = sshll.u32 [#allocation2], 4
      %s31 = int_to_ptr.vmem [resolvable:$true] %s30
      %33 = dma.hbm_to_vmem [thread:$0]  %s0, 32, %s31, [#allocation3]
    $region5: #{tpu_custom_call.1} parent=1 // pred_fallthru
      _
    // Predicated region
    $region6: #{tpu_custom_call.1} parent=1 // pred_check
      _
    $region7: #{tpu_custom_call.1} parent=1 // pred_check_branch
      %35 = sbr.rel (0) target = $region9
    $region8: #{tpu_custom_call.1} parent=1 // pred_region
      %s37 = ssub.s32 128, 128
      %38 = vsyncadd [#allocation6], %s37
      %s39 = sshll.u32 [#allocation5], 4
      %s40 = int_to_ptr.vmem [resolvable:$true] %s39
      %45 = dma.hbm_to_vmem [thread:$0]  %s1, 128, %s40, [#allocation6], 64, 64, 4
    $region9: #{tpu_custom_call.1} parent=1 // pred_fallthru
      _
    // Predicated region
    $region10: #{tpu_custom_call.1} parent=1 // pred_check
      _
    $region11: #{tpu_custom_call.1} parent=1 // pred_check_branch
      %47 = sbr.rel (0) target = $region13
    $region12: #{tpu_custom_call.1} parent=1 // pred_region
      _
    $region13: #{tpu_custom_call.1} parent=1 // pred_fallthru
      _
    // Predicated region
    $region14: #{tpu_custom_call.1} parent=1 // pred_check
      _
    $region15: #{tpu_custom_call.1} parent=1 // pred_check_branch
      %49 = sbr.rel (0) target = $region17
    $region16: #{tpu_custom_call.1} parent=1 // pred_region
      %s51 = ssub.s32 256, 256
      %52 = vsyncadd [#allocation6], %s51
      %s53 = sshll.u32 [#allocation7], 4
      %s54 = int_to_ptr.vmem [resolvable:$true] %s53
      %59 = dma.hbm_to_vmem [thread:$0]  %s3, 256, %s54, [#allocation6], 64, 64, 4
    $region17: #{tpu_custom_call.1} parent=1 // pred_fallthru
      _
    // Predicated region
    $region18: #{tpu_custom_call.1} parent=1 // pred_check
      _
    $region19: #{tpu_custom_call.1} parent=1 // pred_check_branch
      %61 = sbr.rel (0) target = $region21
    $region20: #{tpu_custom_call.1} parent=1 // pred_region
      _
    $region21: #{tpu_custom_call.1} parent=1 // pred_fallthru
      _
    // Predicated region
    $region22: #{tpu_custom_call.1} parent=1 // pred_check
      _
    $region23: #{tpu_custom_call.1} parent=1 // pred_check_branch
      %63 = sbr.rel (0) target = $region25
    $region24: #{tpu_custom_call.1} parent=1 // pred_region
      %s65 = ssub.s32 256, 256
      %66 = vsyncadd [#allocation9], %s65
      %s67 = sshll.u32 [#allocation8], 4
      %s68 = int_to_ptr.vmem [resolvable:$true] %s67
      %73 = dma.hbm_to_vmem [thread:$0]  %s5, 256, %s68, [#allocation9], 64, 64, 4
    $region25: #{tpu_custom_call.1} parent=1 // pred_fallthru
      _
    // Predicated region
    $region26: #{tpu_custom_call.1} parent=1 // pred_check
      _
    $region27: #{tpu_custom_call.1} parent=1 // pred_check_branch
      %75 = sbr.rel (0) target = $region29
    $region28: #{tpu_custom_call.1} parent=1 // pred_region
      _
    $region29: #{tpu_custom_call.1} parent=1 // pred_fallthru
      _
    // Predicated region
    $region30: #{tpu_custom_call.1} parent=1 // pred_check
      _
    $region31: #{tpu_custom_call.1} parent=1 // pred_check_branch
      %77 = sbr.rel (0) target = $region33
    $region32: #{tpu_custom_call.1} parent=1 // pred_region
      %s79 = ssub.s32 256, 256
      %80 = vsyncadd [#allocation9], %s79
      %s81 = sshll.u32 [#allocation10], 4
      %s82 = int_to_ptr.vmem [resolvable:$true] %s81
      %87 = dma.hbm_to_vmem [thread:$0]  %s7, 256, %s82, [#allocation9], 64, 64, 4
    $region33: #{tpu_custom_call.1} parent=1 // pred_fallthru
      _
    // Predicated region
    $region34: #{tpu_custom_call.1} parent=1 // pred_check
      _
    $region35: #{tpu_custom_call.1} parent=1 // pred_check_branch
      %89 = sbr.rel (0) target = $region37
    $region36: #{tpu_custom_call.1} parent=1 // pred_region
      _
    $region37: #{tpu_custom_call.1} parent=1 // pred_fallthru
      _
    // Predicated region
    $region38: #{tpu_custom_call.1} parent=1 // pred_check
      _
    $region39: #{tpu_custom_call.1} parent=1 // pred_check_branch
      %91 = sbr.rel (0) target = $region41
    $region40: #{tpu_custom_call.1} parent=1 // pred_region
      %s93 = ssub.s32 512, 512
      %94 = vsyncadd [#allocation12], %s93
      %s95 = sshll.u32 [#allocation11], 4
      %s96 = int_to_ptr.vmem [resolvable:$true] %s95
      %101 = dma.hbm_to_vmem [thread:$0]  %s9, 512, %s96, [#allocation12], 128, 128, 8
    $region41: #{tpu_custom_call.1} parent=1 // pred_fallthru
      _
    // Predicated region
    $region42: #{tpu_custom_call.1} parent=1 // pred_check
      _
    $region43: #{tpu_custom_call.1} parent=1 // pred_check_branch
      %103 = sbr.rel (0) target = $region45
    $region44: #{tpu_custom_call.1} parent=1 // pred_region
      _
    $region45: #{tpu_custom_call.1} parent=1 // pred_fallthru
      _
    // Predicated region
    $region46: #{tpu_custom_call.1} parent=1 // pred_check
      _
    $region47: #{tpu_custom_call.1} parent=1 // pred_check_branch
      %105 = sbr.rel (0) target = $region49
    $region48: #{tpu_custom_call.1} parent=1 // pred_region
      %106 = dma.done [#allocation3], 32
    $region49: #{tpu_custom_call.1} parent=1 // pred_fallthru
      _
    // Predicated region
    $region50: #{tpu_custom_call.1} parent=1 // pred_check
      _
    $region51: #{tpu_custom_call.1} parent=1 // pred_check_branch
      %108 = sbr.rel (0) target = $region53
    $region52: #{tpu_custom_call.1} parent=1 // pred_region
      %109 = dma.done [#allocation6], 128
    $region53: #{tpu_custom_call.1} parent=1 // pred_fallthru
      _
    // Predicated region
    $region54: #{tpu_custom_call.1} parent=1 // pred_check
      _
    $region55: #{tpu_custom_call.1} parent=1 // pred_check_branch
      %111 = sbr.rel (0) target = $region57
    $region56: #{tpu_custom_call.1} parent=1 // pred_region
      %112 = dma.done [#allocation6], 256
    $region57: #{tpu_custom_call.1} parent=1 // pred_fallthru
      _
    // Predicated region
    $region58: #{tpu_custom_call.1} parent=1 // pred_check
      _
    $region59: #{tpu_custom_call.1} parent=1 // pred_check_branch
      %114 = sbr.rel (0) target = $region61
    $region60: #{tpu_custom_call.1} parent=1 // pred_region
      %115 = dma.done [#allocation9], 256
    $region61: #{tpu_custom_call.1} parent=1 // pred_fallthru
      _
    // Predicated region
    $region62: #{tpu_custom_call.1} parent=1 // pred_check
      _
    $region63: #{tpu_custom_call.1} parent=1 // pred_check_branch
      %117 = sbr.rel (0) target = $region65
    $region64: #{tpu_custom_call.1} parent=1 // pred_region
      %118 = dma.done [#allocation9], 256
    $region65: #{tpu_custom_call.1} parent=1 // pred_fallthru
      _
    // Predicated region
    $region66: #{tpu_custom_call.1} parent=1 // pred_check
      _
    $region67: #{tpu_custom_call.1} parent=1 // pred_check_branch
      %120 = sbr.rel (0) target = $region69
    $region68: #{tpu_custom_call.1} parent=1 // pred_region
      %121 = dma.done [#allocation12], 512
    $region69: #{tpu_custom_call.1} parent=1 // pred_fallthru
      _
    %v123 = vld [vmem:[#allocation2] sm:$0x3]
    %v124 = vld [vmem:[#allocation5] sm:$0xf]
    %v125 = vld [vmem:[#allocation5 + $0x4] sm:$0xf]
    %v126 = vld [vmem:[%s2] sm:$0x1]
    %v128 = vlaneseq
    %v129 = vshrl.u32 %v128, 7
    %v130 = vsub.s32 0, %v129
    %v131 = vrot.slane %v126, %v130
    %v135 = vunpack.c.l.b16 %v124
    %v136 = vunpack.c.l.b16 %v125
    %v137 = vpack.c.b16 %v136, %v135
    %vm139 = vcmask 130048
    %v141 = vsel %vm139, %v123, 0
    %143 = vmatprep.subr.bf16.mxu0 0
    %144 = vmatpush1.bf16.msra.mxu0 0
    %145 = vmatprep.subr.bf16.mxu0 0
    %146 = vmatpush1.bf16.msra.mxu0 0
    %147 = vmatprep.subr.bf16.mxu0 0
    %148 = vmatpush1.bf16.msra.mxu0 0
    %149 = vmatprep.subr.bf16.mxu0 0
    %150 = vmatpush1.bf16.msra.mxu0 0
    %151 = vmatprep.subr.bf16.mxu0 0
    %152 = vmatpush1.bf16.msra.mxu0 0
    %153 = vmatprep.subr.bf16.mxu0 0
    %154 = vmatpush1.bf16.msra.mxu0 0
    %155 = vmatprep.subr.bf16.mxu0 0
    %156 = vmatpush1.bf16.msra.mxu0 0
    %157 = vmatprep.subr.bf16.mxu0 0
    %158 = vmatpush1.bf16.msra.mxu0 %v137
    %159 = vmatprep.subr.bf16.mxu0 0
    %160 = vmatpush2.bf16.msra.mxu0 0
    %161 = vmatprep.subr.bf16.mxu0 0
    %162 = vmatpush2.bf16.msra.mxu0 0
    %163 = vmatprep.subr.bf16.mxu0 0
    %164 = vmatpush2.bf16.msra.mxu0 0
    %165 = vmatprep.subr.bf16.mxu0 0
    %166 = vmatpush2.bf16.msra.mxu0 0
    %167 = vmatprep.subr.bf16.mxu0 0
    %168 = vmatpush2.bf16.msra.mxu0 0
    %169 = vmatprep.subr.bf16.mxu0 0
    %170 = vmatpush2.bf16.msra.mxu0 0
    %171 = vmatprep.subr.bf16.mxu0 0
    %172 = vmatpush2.bf16.msra.mxu0 0
    %173 = vmatprep.subr.bf16.mxu0 0
    %174 = vmatpush2.bf16.msra.mxu0 0
    %175 = vmatprep.mubr.bf16.mxu0 0
    %176 = vmatmul.mubr.bf16.gmra.mxu0 %v141
    %v177 = vpop.f32.mrf.mxu0
    %v178 = vadd.f32 %v131, %v177
    %v179 = vpop.f32.mrf.mxu0
    %v180 = vpop.f32.mrf.mxu0
    %v181 = vpop.f32.mrf.mxu0
    %182 = vdwg.mxu0
    %v183 = vmax.f32 %v178, 0.0
    %v184 = vpack.c.bf16 %v183, %v183
    %v185 = vld [vmem:[#allocation7] sm:$0xf]
    %v186 = vld [vmem:[#allocation7 + $0x4] sm:$0xf]
    %v187 = vld [vmem:[#allocation7 + $0x8] sm:$0xf]
    %v188 = vld [vmem:[#allocation7 + $0xc] sm:$0xf]
    %v189 = vld [vmem:[%s4] sm:$0x1]
    %v191 = vlaneseq
    %v192 = vshrl.u32 %v191, 7
    %v193 = vsub.s32 0, %v192
    %v194 = vrot.slane %v189, %v193
    %v200 = vunpack.c.l.b16 %v185
    %v201 = vunpack.c.l.b16 %v186
    %v202 = vunpack.c.l.b16 %v187
    %v203 = vunpack.c.l.b16 %v188
    %v204 = vpack.c.b16 %v201, %v200
    %v205 = vpack.c.b16 %v203, %v202
    %vm208 = vcmask 261120
    %v210 = vsel %vm208, %v184, 0
    %212 = vmatprep.subr.bf16.mxu0 0
    %213 = vmatpush1.bf16.msra.mxu0 0
    %214 = vmatprep.subr.bf16.mxu0 0
    %215 = vmatpush1.bf16.msra.mxu0 0
    %216 = vmatprep.subr.bf16.mxu0 0
    %217 = vmatpush1.bf16.msra.mxu0 0
    %218 = vmatprep.subr.bf16.mxu0 0
    %219 = vmatpush1.bf16.msra.mxu0 0
    %220 = vmatprep.subr.bf16.mxu0 0
    %221 = vmatpush1.bf16.msra.mxu0 0
    %222 = vmatprep.subr.bf16.mxu0 0
    %223 = vmatpush1.bf16.msra.mxu0 0
    %224 = vmatprep.subr.bf16.mxu0 0
    %225 = vmatpush1.bf16.msra.mxu0 %v205
    %226 = vmatprep.subr.bf16.mxu0 0
    %227 = vmatpush1.bf16.msra.mxu0 %v204
    %228 = vmatprep.subr.bf16.mxu0 0
    %229 = vmatpush2.bf16.msra.mxu0 0
    %230 = vmatprep.subr.bf16.mxu0 0
    %231 = vmatpush2.bf16.msra.mxu0 0
    %232 = vmatprep.subr.bf16.mxu0 0
    %233 = vmatpush2.bf16.msra.mxu0 0
    %234 = vmatprep.subr.bf16.mxu0 0
    %235 = vmatpush2.bf16.msra.mxu0 0
    %236 = vmatprep.subr.bf16.mxu0 0
    %237 = vmatpush2.bf16.msra.mxu0 0
    %238 = vmatprep.subr.bf16.mxu0 0
    %239 = vmatpush2.bf16.msra.mxu0 0
    %240 = vmatprep.subr.bf16.mxu0 0
    %241 = vmatpush2.bf16.msra.mxu0 0
    %242 = vmatprep.subr.bf16.mxu0 0
    %243 = vmatpush2.bf16.msra.mxu0 0
    %244 = vmatprep.mubr.bf16.mxu0 0
    %245 = vmatmul.mubr.bf16.gmra.mxu0 %v210
    %v246 = vpop.f32.mrf.mxu0
    %v247 = vadd.f32 %v194, %v246
    %v248 = vpop.f32.mrf.mxu0
    %v249 = vpop.f32.mrf.mxu0
    %v250 = vpop.f32.mrf.mxu0
    %251 = vdwg.mxu0
    %v252 = vmax.f32 %v247, 0.0
    %v253 = vpack.c.bf16 %v252, %v252
    %v254 = vld [vmem:[#allocation8] sm:$0xf]
    %v255 = vld [vmem:[#allocation8 + $0x4] sm:$0xf]
    %v256 = vld [vmem:[#allocation8 + $0x8] sm:$0xf]
    %v257 = vld [vmem:[#allocation8 + $0xc] sm:$0xf]
    %v258 = vld [vmem:[%s6] sm:$0x1]
    %v260 = vlaneseq
    %v261 = vshrl.u32 %v260, 7
    %v262 = vsub.s32 0, %v261
    %v263 = vrot.slane %v258, %v262
    %v269 = vunpack.c.l.b16 %v254
    %v270 = vunpack.c.l.b16 %v255
    %v271 = vunpack.c.l.b16 %v256
    %v272 = vunpack.c.l.b16 %v257
    %v273 = vpack.c.b16 %v270, %v269
    %v274 = vpack.c.b16 %v272, %v271
    %v278 = vsel %vm208, %v253, 0
    %280 = vmatprep.subr.bf16.mxu0 0
    %281 = vmatpush1.bf16.msra.mxu0 0
    %282 = vmatprep.subr.bf16.mxu0 0
    %283 = vmatpush1.bf16.msra.mxu0 0
    %284 = vmatprep.subr.bf16.mxu0 0
    %285 = vmatpush1.bf16.msra.mxu0 0
    %286 = vmatprep.subr.bf16.mxu0 0
    %287 = vmatpush1.bf16.msra.mxu0 0
    %288 = vmatprep.subr.bf16.mxu0 0
    %289 = vmatpush1.bf16.msra.mxu0 0
    %290 = vmatprep.subr.bf16.mxu0 0
    %291 = vmatpush1.bf16.msra.mxu0 0
    %292 = vmatprep.subr.bf16.mxu0 0
    %293 = vmatpush1.bf16.msra.mxu0 %v274
    %294 = vmatprep.subr.bf16.mxu0 0
    %295 = vmatpush1.bf16.msra.mxu0 %v273
    %296 = vmatprep.subr.bf16.mxu0 0
    %297 = vmatpush2.bf16.msra.mxu0 0
    %298 = vmatprep.subr.bf16.mxu0 0
    %299 = vmatpush2.bf16.msra.mxu0 0
    %300 = vmatprep.subr.bf16.mxu0 0
    %301 = vmatpush2.bf16.msra.mxu0 0
    %302 = vmatprep.subr.bf16.mxu0 0
    %303 = vmatpush2.bf16.msra.mxu0 0
    %304 = vmatprep.subr.bf16.mxu0 0
    %305 = vmatpush2.bf16.msra.mxu0 0
    %306 = vmatprep.subr.bf16.mxu0 0
    %307 = vmatpush2.bf16.msra.mxu0 0
    %308 = vmatprep.subr.bf16.mxu0 0
    %309 = vmatpush2.bf16.msra.mxu0 0
    %310 = vmatprep.subr.bf16.mxu0 0
    %311 = vmatpush2.bf16.msra.mxu0 0
    %312 = vmatprep.mubr.bf16.mxu0 0
    %313 = vmatmul.mubr.bf16.gmra.mxu0 %v278
    %v314 = vpop.f32.mrf.mxu0
    %v315 = vadd.f32 %v263, %v314
    %v316 = vpop.f32.mrf.mxu0
    %v317 = vpop.f32.mrf.mxu0
    %v318 = vpop.f32.mrf.mxu0
    %319 = vdwg.mxu0
    %v320 = vmax.f32 %v315, 0.0
    %v321 = vpack.c.bf16 %v320, %v320
    %v322 = vld [vmem:[#allocation10] sm:$0xf]
    %v323 = vld [vmem:[#allocation10 + $0x4] sm:$0xf]
    %v324 = vld [vmem:[#allocation10 + $0x8] sm:$0xf]
    %v325 = vld [vmem:[#allocation10 + $0xc] sm:$0xf]
    %v326 = vld [vmem:[%s8] sm:$0x1]
    %v328 = vlaneseq
    %v329 = vshrl.u32 %v328, 7
    %v330 = vsub.s32 0, %v329
    %v331 = vrot.slane %v326, %v330
    %v337 = vunpack.c.l.b16 %v322
    %v338 = vunpack.c.l.b16 %v323
    %v339 = vunpack.c.l.b16 %v324
    %v340 = vunpack.c.l.b16 %v325
    %v341 = vpack.c.b16 %v338, %v337
    %v342 = vpack.c.b16 %v340, %v339
    %v346 = vsel %vm208, %v321, 0
    %348 = vmatprep.subr.bf16.mxu0 0
    %349 = vmatpush1.bf16.msra.mxu0 0
    %350 = vmatprep.subr.bf16.mxu0 0
    %351 = vmatpush1.bf16.msra.mxu0 0
    %352 = vmatprep.subr.bf16.mxu0 0
    %353 = vmatpush1.bf16.msra.mxu0 0
    %354 = vmatprep.subr.bf16.mxu0 0
    %355 = vmatpush1.bf16.msra.mxu0 0
    %356 = vmatprep.subr.bf16.mxu0 0
    %357 = vmatpush1.bf16.msra.mxu0 0
    %358 = vmatprep.subr.bf16.mxu0 0
    %359 = vmatpush1.bf16.msra.mxu0 0
    %360 = vmatprep.subr.bf16.mxu0 0
    %361 = vmatpush1.bf16.msra.mxu0 %v342
    %362 = vmatprep.subr.bf16.mxu0 0
    %363 = vmatpush1.bf16.msra.mxu0 %v341
    %364 = vmatprep.subr.bf16.mxu0 0
    %365 = vmatpush2.bf16.msra.mxu0 0
    %366 = vmatprep.subr.bf16.mxu0 0
    %367 = vmatpush2.bf16.msra.mxu0 0
    %368 = vmatprep.subr.bf16.mxu0 0
    %369 = vmatpush2.bf16.msra.mxu0 0
    %370 = vmatprep.subr.bf16.mxu0 0
    %371 = vmatpush2.bf16.msra.mxu0 0
    %372 = vmatprep.subr.bf16.mxu0 0
    %373 = vmatpush2.bf16.msra.mxu0 0
    %374 = vmatprep.subr.bf16.mxu0 0
    %375 = vmatpush2.bf16.msra.mxu0 0
    %376 = vmatprep.subr.bf16.mxu0 0
    %377 = vmatpush2.bf16.msra.mxu0 0
    %378 = vmatprep.subr.bf16.mxu0 0
    %379 = vmatpush2.bf16.msra.mxu0 0
    %380 = vmatprep.mubr.bf16.mxu0 0
    %381 = vmatmul.mubr.bf16.gmra.mxu0 %v346
    %v382 = vpop.f32.mrf.mxu0
    %v383 = vadd.f32 %v331, %v382
    %v384 = vpop.f32.mrf.mxu0
    %v385 = vpop.f32.mrf.mxu0
    %v386 = vpop.f32.mrf.mxu0
    %387 = vdwg.mxu0
    %v388 = vmax.f32 %v383, 0.0
    %v389 = vpack.c.bf16 %v388, %v388
    %v390 = vld [vmem:[#allocation11] sm:$0xff]
    %v391 = vld [vmem:[#allocation11 + $0x8] sm:$0xff]
    %v392 = vld [vmem:[#allocation11 + $0x10] sm:$0xff]
    %v393 = vld [vmem:[#allocation11 + $0x18] sm:$0xff]
    %v394 = vld [vmem:[%s10] sm:$0x3]
    %v396 = vlaneseq
    %v397 = vshrl.u32 %v396, 7
    %v398 = vsub.s32 0, %v397
    %v399 = vrot.slane %v394, %v398
    %v400 = vlaneseq
    %v401 = vshrl.u32 %v400, 7
    %v402 = vsub.s32 1, %v401
    %v403 = vrot.slane %v394, %v402
    %v410 = vunpack.c.l.b16 %v390
    %v411 = vunpack.c.h.b16 %v390
    %v412 = vunpack.c.l.b16 %v391
    %v413 = vunpack.c.h.b16 %v391
    %v414 = vunpack.c.l.b16 %v392
    %v415 = vunpack.c.h.b16 %v392
    %v416 = vunpack.c.l.b16 %v393
    %v417 = vunpack.c.h.b16 %v393
    %v418 = vpack.c.b16 %v412, %v410
    %v419 = vpack.c.b16 %v413, %v411
    %v420 = vpack.c.b16 %v416, %v414
    %v421 = vpack.c.b16 %v417, %v415
    %v427 = vsel %vm208, %v389, 0
    %429 = vmatprep.subr.bf16.mxu0 0
    %430 = vmatpush1.bf16.msra.mxu0 0
    %431 = vmatprep.subr.bf16.mxu0 0
    %432 = vmatpush1.bf16.msra.mxu0 0
    %433 = vmatprep.subr.bf16.mxu0 0
    %434 = vmatpush1.bf16.msra.mxu0 0
    %435 = vmatprep.subr.bf16.mxu0 0
    %436 = vmatpush1.bf16.msra.mxu0 0
    %437 = vmatprep.subr.bf16.mxu0 0
    %438 = vmatpush1.bf16.msra.mxu0 0
    %439 = vmatprep.subr.bf16.mxu0 0
    %440 = vmatpush1.bf16.msra.mxu0 0
    %441 = vmatprep.subr.bf16.mxu0 %v421
    %442 = vmatpush1.bf16.msra.mxu0 %v420
    %443 = vmatprep.subr.bf16.mxu0 %v419
    %444 = vmatpush1.bf16.msra.mxu0 %v418
    %445 = vmatprep.subr.bf16.mxu0 0
    %446 = vmatpush2.bf16.msra.mxu0 0
    %447 = vmatprep.subr.bf16.mxu0 0
    %448 = vmatpush2.bf16.msra.mxu0 0
    %449 = vmatprep.subr.bf16.mxu0 0
    %450 = vmatpush2.bf16.msra.mxu0 0
    %451 = vmatprep.subr.bf16.mxu0 0
    %452 = vmatpush2.bf16.msra.mxu0 0
    %453 = vmatprep.subr.bf16.mxu0 0
    %454 = vmatpush2.bf16.msra.mxu0 0
    %455 = vmatprep.subr.bf16.mxu0 0
    %456 = vmatpush2.bf16.msra.mxu0 0
    %457 = vmatprep.subr.bf16.mxu0 0
    %458 = vmatpush2.bf16.msra.mxu0 0
    %459 = vmatprep.subr.bf16.mxu0 0
    %460 = vmatpush2.bf16.msra.mxu0 0
    %461 = vmatprep.mubr.bf16.mxu0 0
    %462 = vmatmul.mubr.bf16.gmra.mxu0 %v427
    %v463 = vpop.f32.mrf.mxu0
    %v464 = vadd.f32 %v399, %v463
    %v465 = vpop.f32.mrf.mxu0
    %v466 = vadd.f32 %v403, %v465
    %v467 = vpop.f32.mrf.mxu0
    %v468 = vpop.f32.mrf.mxu0
    %469 = vdwg.mxu0
    %470 = vst [vmem:[#allocation13] sm:$0xf] %v464
    %vm471 = vcmp.gt.f32.partialorder %v466, 20.0
    %v472 = vmin.f32 %v466, 20.0
    %v473 = vmul.f32 %v472, 1.442695
    %v474 = vpow.pop %v473
    %v475 = vadd.f32 %v474, 1.0
    %v476 = vlog2.pop %v475
    %v477 = vmul.f32 %v476, 0.6931472
    %v478 = vmul.f32 -0.5, %v474
    %v479 = vadd.f32 %v478, 1.0
    %v480 = vmul.f32 %v479, %v474
    %v481 = vand.u32 2147483647, %v474
    %vm482 = vcmp.lt.f32.partialorder %v481, 0.0004427343
    %v483 = vsel %vm482, %v480, %v477
    %v484 = vsel %vm471, %v466, %v483
    %485 = vst [vmem:[#allocation14] sm:$0xf] %v484
    // Predicated region
    $region70: #{tpu_custom_call.1} parent=1 // pred_check
      _
    $region71: #{tpu_custom_call.1} parent=1 // pred_check_branch
      %487 = sbr.rel (0) target = $region73
    $region72: #{tpu_custom_call.1} parent=1 // pred_region
      %s489 = ssub.s32 64, 64
      %490 = vsyncadd [#allocation4], %s489
      %s492 = sshll.u32 [#allocation13], 4
      %s493 = int_to_ptr.vmem [resolvable:$true] %s492
      %495 = dma.vmem_to_hbm [thread:$0]  %s493, 64, %s11, [#allocation4]
    $region73: #{tpu_custom_call.1} parent=1 // pred_fallthru
      _
    // Predicated region
    $region74: #{tpu_custom_call.1} parent=1 // pred_check
      _
    $region75: #{tpu_custom_call.1} parent=1 // pred_check_branch
      %497 = sbr.rel (0) target = $region77
    $region76: #{tpu_custom_call.1} parent=1 // pred_region
      %s499 = ssub.s32 64, 64
      %500 = vsyncadd [#allocation15], %s499
      %s502 = sshll.u32 [#allocation14], 4
      %s503 = int_to_ptr.vmem [resolvable:$true] %s502
      %505 = dma.vmem_to_hbm [thread:$0]  %s503, 64, %s12, [#allocation15]
    $region77: #{tpu_custom_call.1} parent=1 // pred_fallthru
      _
    // Predicated region
    $region78: #{tpu_custom_call.1} parent=1 // pred_check
      _
    $region79: #{tpu_custom_call.1} parent=1 // pred_check_branch
      %507 = sbr.rel (0) target = $region81
    $region80: #{tpu_custom_call.1} parent=1 // pred_region
      %508 = dma.done [#allocation4], 64
    $region81: #{tpu_custom_call.1} parent=1 // pred_fallthru
      _
    // Predicated region
    $region82: #{tpu_custom_call.1} parent=1 // pred_check
      _
    $region83: #{tpu_custom_call.1} parent=1 // pred_check_branch
      %510 = sbr.rel (0) target = $region85
    $region84: #{tpu_custom_call.1} parent=1 // pred_region
      %511 = dma.done [#allocation15], 64
    $region85: #{tpu_custom_call.1} parent=1 // pred_fallthru
      _
    %512 = vsyncpa [#allocation3], 1
    %513 = vsyncpa [#allocation6], 1
    %514 = vsyncpa [#allocation9], 1
    %515 = vsyncpa [#allocation12], 1
    %516 = vsyncpa [#allocation4], 1
    %517 = vsyncpa [#allocation15], 1

</llo_original>
